<compile_context>
chip_gen: v7x
topology: tpu7x:2x2x1
jax: 0.10.0
libtpu: 0.0.40
codegen_flags: <defaults>
</compile_context>

<pallas_src>
import jax
import jax.numpy as jnp
from jax.experimental import pallas as pl
from jax.experimental.pallas import tpu as pltpu


def _round_up(x, m):
    return (x + m - 1) // m * m


def _vmem_limit_bytes():
    """Generation-aware VMEM limit (~75% of physical; v7x 64 MiB, v5e/v6e 128 MiB)."""
    try:
        cap = int(pltpu.get_tpu_info().vmem_capacity_bytes)
        return min(int(cap * 0.75), 100 * 1024 * 1024)
    except Exception:
        return 64 * 1024 * 1024


def _choose_tb(B, tb_max):
    """Pick a batch tile (multiple of 8) minimizing padded rows + per-step
    overhead, avoiding single-step grids (pipelining + both v7x TCs)."""
    B8 = _round_up(B, 8)
    hi = max(8, min(_round_up(max(tb_max, 8), 8), B8))
    best_tb, best_cost = 8, None
    for tb in range(8, hi + 1, 8):
        b_p = _round_up(B, tb)
        steps = b_p // tb
        # padded rows + ~0.35us/step equivalent + penalty for a 1-step grid
        cost = (b_p - B) + 192 * steps + (b_p if steps < 2 else 0)
        if best_cost is None or cost < best_cost or (cost == best_cost and tb > best_tb):
            best_tb, best_cost = tb, cost
    return best_tb


def _mlp_kernel(x_ref, w1_ref, b1_ref, w2_ref, b2_ref, w3_ref, b3_ref,
                out_ref, layer1_ref):
    x = x_ref[...]

    # linear1 ('layer1' is the pre-activation linear1 output, as in the module)
    z1 = jnp.dot(x, w1_ref[...], preferred_element_type=jnp.float32) + b1_ref[...]
    layer1_ref[...] = z1[:, :layer1_ref.shape[1]].astype(layer1_ref.dtype)

    # activation1: ReLU (f32 elementwise)
    h1 = jnp.maximum(z1, 0.0)

    # linear2 (cast to the weight dtype so bf16 mode feeds the MXU with bf16
    # operands; a no-op in f32 mode)
    z2 = jnp.dot(h1.astype(w2_ref.dtype), w2_ref[...],
                 preferred_element_type=jnp.float32) + b2_ref[...]

    # activation2: Softplus, numerically stable: max(x,0) + log1p(exp(-|x|))
    h2 = jnp.maximum(z2, 0.0) + jnp.log1p(jnp.exp(-jnp.abs(z2)))

    # drop1: Dropout -> identity at inference time.

    # linear3 (N kept 128-padded for the MXU; only the true class columns are
    # written back -> lane-narrow output, no 128x writeback inflation)
    z3 = jnp.dot(h2.astype(w3_ref.dtype), w3_ref[...],
                 preferred_element_type=jnp.float32) + b3_ref[...]
    out_ref[...] = z3[:, :out_ref.shape[1]].astype(out_ref.dtype)


def prepare_params(params, *, compute_dtype=jnp.bfloat16, layer1_dtype=None):
    """Pad & cast weights ONCE (hoisted out of the per-call path).

    MXU K/N dims (D, n1, n2, C) are zero-padded to multiples of 128; zero
    padding is mathematically inert.  Biases stay f32 (added after the
    f32-accumulated dot).
    """
    w1, b1, w2, b2, w3, b3 = (params[k] for k in ("w1", "b1", "w2", "b2", "w3", "b3"))
    D, n1 = w1.shape
    n2, C = w2.shape[1], w3.shape[1]
    D_p, n1_p, n2_p, C_p = (_round_up(d, 128) for d in (D, n1, n2, C))
    dt = jnp.dtype(compute_dtype)
    l1_dt = jnp.dtype(layer1_dtype) if layer1_dtype is not None else dt

    w1_p = jnp.zeros((D_p, n1_p), dt).at[:D, :n1].set(w1.astype(dt))
    w2_p = jnp.zeros((n1_p, n2_p), dt).at[:n1, :n2].set(w2.astype(dt))
    w3_p = jnp.zeros((n2_p, C_p), dt).at[:n2, :C].set(w3.astype(dt))
    b1_p = jnp.zeros((1, n1_p), jnp.float32).at[0, :n1].set(b1.astype(jnp.float32))
    b2_p = jnp.zeros((1, n2_p), jnp.float32).at[0, :n2].set(b2.astype(jnp.float32))
    b3_p = jnp.zeros((1, C_p), jnp.float32).at[0, :C].set(b3.astype(jnp.float32))

    return dict(w1=w1_p, b1=b1_p, w2=w2_p, b2=b2_p, w3=w3_p, b3=b3_p,
                dims=(D, n1, n2, C), compute_dtype=dt, layer1_dtype=l1_dt)


def two_layers_mlp_forward(x, prepared, nb_classes, *, tb_max=1024):
    """Fused forward pass. Returns (logits, {'layer1': layer1_out})."""
    D, n1, n2, C = prepared["dims"]
    dt = prepared["compute_dtype"]
    l1_dt = prepared["layer1_dtype"]
    w1_p, b1_p = prepared["w1"], prepared["b1"]
    w2_p, b2_p = prepared["w2"], prepared["b2"]
    w3_p, b3_p = prepared["w3"], prepared["b3"]
    D_p, n1_p = w1_p.shape
    n2_p, C_p = w3_p.shape

    B = x.shape[0]
    assert x.shape[1] == D and C == nb_classes

    itemsize = dt.itemsize
    vmem_limit = _vmem_limit_bytes()

    # VMEM budget -> cap on the batch tile (conservatively assume
    # double-buffered weights in case single-buffering is unavailable).
    n1_lane = _round_up(n1, 128)
    c_lane = _round_up(C, 128)
    weight_bytes = (2 * (D_p * n1_p + n1_p * n2_p + n2_p * C_p) * itemsize
                    + 2 * (n1_p + n2_p + C_p) * 4 * 8)
    per_row_bytes = (2 * (D_p * itemsize + n1_lane * l1_dt.itemsize + c_lane * 4)
                     + 4 * (2 * n1_p + 2 * n2_p + c_lane))   # f32 intermediates
    budget = int(0.5 * vmem_limit) - weight_bytes
    tb_fit = max(8, (budget // max(per_row_bytes, 1)) // 8 * 8)
    TB = _choose_tb(B, min(tb_max, tb_fit))
    B_p = _round_up(B, TB)
    grid = (B_p // TB,)

    # Input: pass straight through when already tile-aligned; otherwise pad
    # (padded rows/cols are inert zeros and are sliced off below).
    if (B, D) == (B_p, D_p):
        x_p = x if x.dtype == dt else x.astype(dt)
    else:
        x_p = jnp.zeros((B_p, D_p), dt).at[:B, :D].set(x.astype(dt))

    def row_spec(cols):
        return pl.BlockSpec((TB, cols), lambda i: (i, 0))

    def fixed_spec(arr):
        # Constant index_map -> block stays VMEM-resident; one buffer is
        # enough (halves resident weight VMEM; matters most on v7x's 64 MiB).
        try:
            return pl.BlockSpec(arr.shape, lambda i: (0, 0),
                                pipeline_mode=pl.Buffered(1))
        except (TypeError, ValueError, AttributeError):
            return pl.BlockSpec(arr.shape, lambda i: (0, 0))

    flops = 2 * B_p * (D_p * n1_p + n1_p * n2_p + n2_p * C_p)
    transcendentals = 2 * B_p * n2_p  # exp + log1p in softplus
    bytes_accessed = (
        B_p * D_p * itemsize                                    # x
        + (D_p * n1_p + n1_p * n2_p + n2_p * C_p) * itemsize    # weights
        + (n1_p + n2_p + C_p) * 4                               # biases
        + B_p * (C * 4 + n1 * l1_dt.itemsize))                  # outputs

    out_p, layer1_p = pl.pallas_call(
        _mlp_kernel,
        out_shape=(
            jax.ShapeDtypeStruct((B_p, C), jnp.float32),   # true class width
            jax.ShapeDtypeStruct((B_p, n1), l1_dt),        # true n1 width
        ),
        grid=grid,
        in_specs=[row_spec(D_p),
                  fixed_spec(w1_p), fixed_spec(b1_p),
                  fixed_spec(w2_p), fixed_spec(b2_p),
                  fixed_spec(w3_p), fixed_spec(b3_p)],
        out_specs=(row_spec(C), row_spec(n1)),
        compiler_params=pltpu.CompilerParams(
            dimension_semantics=("parallel",),
            vmem_limit_bytes=vmem_limit),
        cost_estimate=pl.CostEstimate(
            flops=flops,
            transcendentals=transcendentals,
            bytes_accessed=bytes_accessed),
    )(x_p, w1_p, b1_p, w2_p, b2_p, w3_p, b3_p)

    out = out_p[:B]
    layer1 = layer1_p[:B]
    if nb_classes == 1:
        out = out.reshape(B)  # x.view(x.size(0))
    return out, {"layer1": layer1}


def init_params(key, data_size, nb_neurons, nb_classes):
    """Deterministic init mimicking nn.Linear's U(-1/sqrt(fan_in), 1/sqrt(fan_in))."""
    ks = jax.random.split(key, 6)

    def linear(kw, kb, fan_in, fan_out):
        bound = 1.0 / jnp.sqrt(jnp.float32(fan_in))
        w = jax.random.uniform(kw, (fan_in, fan_out), jnp.float32, -bound, bound)
        b = jax.random.uniform(kb, (fan_out,), jnp.float32, -bound, bound)
        return w, b

    w1, b1 = linear(ks[0], ks[1], data_size, nb_neurons[0])
    w2, b2 = linear(ks[2], ks[3], nb_neurons[0], nb_neurons[1])
    w3, b3 = linear(ks[4], ks[5], nb_neurons[1], nb_classes)
    return {"w1": w1, "b1": b1, "w2": w2, "b2": b2, "w3": w3, "b3": b3}


def _reference(x, params, compute_dtype=jnp.float32):
    """Pure-JAX reference with the same dtype strategy (dropout = identity)."""
    dt = compute_dtype
    w1, b1, w2, b2, w3, b3 = (params[k] for k in ("w1", "b1", "w2", "b2", "w3", "b3"))
    z1 = jnp.dot(x.astype(dt), w1.astype(dt), preferred_element_type=jnp.float32) + b1
    h1 = jnp.maximum(z1, 0.0)
    z2 = jnp.dot(h1.astype(dt), w2.astype(dt), preferred_element_type=jnp.float32) + b2
    h2 = jnp.maximum(z2, 0.0) + jnp.log1p(jnp.exp(-jnp.abs(z2)))
    z3 = jnp.dot(h2.astype(dt), w3.astype(dt), preferred_element_type=jnp.float32) + b3
    return z3, z1


if __name__ == "__main__":
    # ---- Case A: small config; exact f32 parity + default bf16 path -------
    key = jax.random.PRNGKey(0)
    k_x, k_p = jax.random.split(key)
    batch, data_size, nb_neurons, nb_classes = 8, 64, (32, 16), 3
    x = jax.random.normal(k_x, (batch, data_size), jnp.float32)
    params = init_params(k_p, data_size, nb_neurons, nb_classes)
    ref_out, ref_l1 = _reference(x, params, jnp.float32)

    prep32 = prepare_params(params, compute_dtype=jnp.float32)
    out32, aux32 = two_layers_mlp_forward(x, prep32, nb_classes)
    out32, l1_32 = jax.block_until_ready((out32, aux32["layer1"]))
    assert out32.shape == (batch, nb_classes)
    assert l1_32.shape == (batch, nb_neurons[0])
    assert jnp.allclose(out32, ref_out, atol=1e-5, rtol=1e-5)
    assert jnp.allclose(l1_32, ref_l1, atol=1e-5, rtol=1e-5)

    prep16 = prepare_params(params)  # default bf16 inputs/weights, f32 accumulate
    out16, aux16 = two_layers_mlp_forward(x, prep16, nb_classes)
    out16, l1_16 = jax.block_until_ready((out16, aux16["layer1"]))
    ref_out16, ref_l1_16 = _reference(x, params, jnp.bfloat16)
    assert jnp.allclose(out16, ref_out16, atol=1e-2, rtol=1e-2)
    assert jnp.allclose(l1_16.astype(jnp.float32), ref_l1_16, atol=1e-2, rtol=1e-2)
    assert jnp.allclose(out16, ref_out, atol=1e-1, rtol=1e-1)  # bf16 sanity vs f32

    # ---- Case B: multi-step grid, aligned no-copy x path, nb_classes == 1 --
    kb_x, kb_p = jax.random.split(jax.random.PRNGKey(1))
    batch_b, ds_b, nn_b, nc_b = 256, 128, (64, 32), 1
    xb = jax.random.normal(kb_x, (batch_b, ds_b), jnp.float32)
    params_b = init_params(kb_p, ds_b, nn_b, nc_b)
    prep_b = prepare_params(params_b)
    out_b, aux_b = two_layers_mlp_forward(xb, prep_b, nc_b)
    out_b, l1_b = jax.block_until_ready((out_b, aux_b["layer1"]))
    ref_out_b, ref_l1_b = _reference(xb, params_b, jnp.bfloat16)
    assert out_b.shape == (batch_b,)                    # x.view(x.size(0))
    assert jnp.allclose(out_b, ref_out_b.reshape(batch_b), atol=1e-2, rtol=1e-2)
    assert jnp.allclose(l1_b.astype(jnp.float32), ref_l1_b, atol=1e-2, rtol=1e-2)

    # ---- Case C: ragged batch + unaligned feature dims ---------------------
    kc_x, kc_p = jax.random.split(jax.random.PRNGKey(2))
    batch_c, ds_c, nn_c, nc_c = 100, 96, (48, 24), 2
    xc = jax.random.normal(kc_x, (batch_c, ds_c), jnp.float32)
    params_c = init_params(kc_p, ds_c, nn_c, nc_c)
    prep_c = prepare_params(params_c)
    out_c, aux_c = two_layers_mlp_forward(xc, prep_c, nc_c)
    out_c, l1_c = jax.block_until_ready((out_c, aux_c["layer1"]))
    ref_out_c, ref_l1_c = _reference(xc, params_c, jnp.bfloat16)
    assert out_c.shape == (batch_c, nc_c)
    assert l1_c.shape == (batch_c, nn_c[0])
    assert jnp.allclose(out_c, ref_out_c, atol=1e-2, rtol=1e-2)
    assert jnp.allclose(l1_c.astype(jnp.float32), ref_l1_c, atol=1e-2, rtol=1e-2)

    print("KERNEL_OK")
</pallas_src>

<mosaic_0001>
module attributes {stable_mosaic.version = 11 : i64} {
  func.func @_mlp_kernel(%arg0: i32, %arg1: memref<8x128xf32, #tpu.memory_space<vmem>>, %arg2: memref<128x128xf32, #tpu.memory_space<vmem>>, %arg3: memref<1x128xf32, #tpu.memory_space<vmem>>, %arg4: memref<128x128xf32, #tpu.memory_space<vmem>>, %arg5: memref<1x128xf32, #tpu.memory_space<vmem>>, %arg6: memref<128x128xf32, #tpu.memory_space<vmem>>, %arg7: memref<1x128xf32, #tpu.memory_space<vmem>>, %arg8: memref<8x3xf32, #tpu.memory_space<vmem>>, %arg9: memref<8x32xf32, #tpu.memory_space<vmem>>) attributes {dimension_semantics = [#tpu.dimension_semantics<parallel>], iteration_bounds = array<i64: 1>, scalar_prefetch = 0 : i64, scratch_operands = 0 : i64, tpu.core_type = #tpu.core_type<tc>, window_params = [{transform_indices = @transform_0, window_bounds = array<i64: 8, 128>}, {pipeline_mode = #tpu.pipeline_mode<synchronous>, transform_indices = @transform_1, window_bounds = array<i64: 128, 128>}, {pipeline_mode = #tpu.pipeline_mode<synchronous>, transform_indices = @transform_2, window_bounds = array<i64: 1, 128>}, {pipeline_mode = #tpu.pipeline_mode<synchronous>, transform_indices = @transform_3, window_bounds = array<i64: 128, 128>}, {pipeline_mode = #tpu.pipeline_mode<synchronous>, transform_indices = @transform_4, window_bounds = array<i64: 1, 128>}, {pipeline_mode = #tpu.pipeline_mode<synchronous>, transform_indices = @transform_5, window_bounds = array<i64: 128, 128>}, {pipeline_mode = #tpu.pipeline_mode<synchronous>, transform_indices = @transform_6, window_bounds = array<i64: 1, 128>}, {transform_indices = @transform_7, window_bounds = array<i64: 8, 3>}, {transform_indices = @transform_8, window_bounds = array<i64: 8, 32>}]} {
    %c0 = arith.constant 0 : index
    %c0_0 = arith.constant 0 : index
    %0 = vector.load %arg1[%c0, %c0_0] : memref<8x128xf32, #tpu.memory_space<vmem>>, vector<8x128xf32>
    %c0_1 = arith.constant 0 : index
    %c0_2 = arith.constant 0 : index
    %1 = vector.load %arg2[%c0_1, %c0_2] : memref<128x128xf32, #tpu.memory_space<vmem>>, vector<128x128xf32>
    %cst = arith.constant dense<0.000000e+00> : vector<8x128xf32>
    %2 = tpu.matmul %0, %1, %cst {dimension_numbers = #tpu.dot_dimension_numbers<[1], [0], [0], [1], [0, 0, 1, 1], [], []>} : vector<8x128xf32>, vector<128x128xf32>, vector<8x128xf32> -> vector<8x128xf32>
    %c0_3 = arith.constant 0 : index
    %c0_4 = arith.constant 0 : index
    %3 = vector.load %arg3[%c0_3, %c0_4] : memref<1x128xf32, #tpu.memory_space<vmem>>, vector<1x128xf32>
    %4 = vector.broadcast %3 : vector<1x128xf32> to vector<8x128xf32>
    %5 = arith.addf %2, %4 : vector<8x128xf32>
    %6 = vector.extract_strided_slice %5 {offsets = [0, 0], sizes = [8, 32], strides = [1, 1]} : vector<8x128xf32> to vector<8x32xf32>
    %c0_5 = arith.constant 0 : index
    %c0_6 = arith.constant 0 : index
    %7 = vector.load %arg9[%c0_5, %c0_6] : memref<8x32xf32, #tpu.memory_space<vmem>>, vector<8x32xf32>
    tpu.vector_store %arg9[%c0_5, %c0_6], %6 {strides = array<i32>} : memref<8x32xf32, #tpu.memory_space<vmem>>, vector<8x32xf32>,
    %cst_7 = arith.constant 0.000000e+00 : f32
    %8 = vector.broadcast %cst_7 : f32 to vector<8x128xf32>
    %9 = arith.maximumf %5, %8 : vector<8x128xf32>
    %c0_8 = arith.constant 0 : index
    %c0_9 = arith.constant 0 : index
    %10 = vector.load %arg4[%c0_8, %c0_9] : memref<128x128xf32, #tpu.memory_space<vmem>>, vector<128x128xf32>
    %cst_10 = arith.constant dense<0.000000e+00> : vector<8x128xf32>
    %11 = tpu.matmul %9, %10, %cst_10 {dimension_numbers = #tpu.dot_dimension_numbers<[1], [0], [0], [1], [0, 0, 1, 1], [], []>} : vector<8x128xf32>, vector<128x128xf32>, vector<8x128xf32> -> vector<8x128xf32>
    %c0_11 = arith.constant 0 : index
    %c0_12 = arith.constant 0 : index
    %12 = vector.load %arg5[%c0_11, %c0_12] : memref<1x128xf32, #tpu.memory_space<vmem>>, vector<1x128xf32>
    %13 = vector.broadcast %12 : vector<1x128xf32> to vector<8x128xf32>
    %14 = arith.addf %11, %13 : vector<8x128xf32>
    %cst_13 = arith.constant 0.000000e+00 : f32
    %15 = vector.broadcast %cst_13 : f32 to vector<8x128xf32>
    %16 = arith.maximumf %14, %15 : vector<8x128xf32>
    %17 = math.absf %14 : vector<8x128xf32>
    %cst_14 = arith.constant 0.000000e+00 : f32
    %18 = vector.broadcast %cst_14 : f32 to vector<8x128xf32>
    %19 = arith.subf %18, %17 : vector<8x128xf32>
    %20 = math.exp %19 : vector<8x128xf32>
    %21 = math.log1p %20 : vector<8x128xf32>
    %22 = arith.addf %16, %21 : vector<8x128xf32>
    %c0_15 = arith.constant 0 : index
    %c0_16 = arith.constant 0 : index
    %23 = vector.load %arg6[%c0_15, %c0_16] : memref<128x128xf32, #tpu.memory_space<vmem>>, vector<128x128xf32>
    %cst_17 = arith.constant dense<0.000000e+00> : vector<8x128xf32>
    %24 = tpu.matmul %22, %23, %cst_17 {dimension_numbers = #tpu.dot_dimension_numbers<[1], [0], [0], [1], [0, 0, 1, 1], [], []>} : vector<8x128xf32>, vector<128x128xf32>, vector<8x128xf32> -> vector<8x128xf32>
    %c0_18 = arith.constant 0 : index
    %c0_19 = arith.constant 0 : index
    %25 = vector.load %arg7[%c0_18, %c0_19] : memref<1x128xf32, #tpu.memory_space<vmem>>, vector<1x128xf32>
    %26 = vector.broadcast %25 : vector<1x128xf32> to vector<8x128xf32>
    %27 = arith.addf %24, %26 : vector<8x128xf32>
    %28 = vector.extract_strided_slice %27 {offsets = [0, 0], sizes = [8, 3], strides = [1, 1]} : vector<8x128xf32> to vector<8x3xf32>
    %c0_20 = arith.constant 0 : index
    %c0_21 = arith.constant 0 : index
    %29 = vector.load %arg8[%c0_20, %c0_21] : memref<8x3xf32, #tpu.memory_space<vmem>>, vector<8x3xf32>
    tpu.vector_store %arg8[%c0_20, %c0_21], %28 {strides = array<i32>} : memref<8x3xf32, #tpu.memory_space<vmem>>, vector<8x3xf32>,
    return
  }
  func.func @transform_0(%arg0: i32) -> (i32, i32) {
    %c0_i32 = arith.constant 0 : i32
    %c0_i32_0 = arith.constant 0 : i32
    return %arg0, %c0_i32 : i32, i32
  }
  func.func @transform_1(%arg0: i32) -> (i32, i32) {
    %c0_i32 = arith.constant 0 : i32
    %c0_i32_0 = arith.constant 0 : i32
    %c0_i32_1 = arith.constant 0 : i32
    return %c0_i32, %c0_i32_0 : i32, i32
  }
  func.func @transform_2(%arg0: i32) -> (i32, i32) {
    %c0_i32 = arith.constant 0 : i32
    %c0_i32_0 = arith.constant 0 : i32
    %c0_i32_1 = arith.constant 0 : i32
    return %c0_i32, %c0_i32_0 : i32, i32
  }
  func.func @transform_3(%arg0: i32) -> (i32, i32) {
    %c0_i32 = arith.constant 0 : i32
    %c0_i32_0 = arith.constant 0 : i32
    %c0_i32_1 = arith.constant 0 : i32
    return %c0_i32, %c0_i32_0 : i32, i32
  }
  func.func @transform_4(%arg0: i32) -> (i32, i32) {
    %c0_i32 = arith.constant 0 : i32
    %c0_i32_0 = arith.constant 0 : i32
    %c0_i32_1 = arith.constant 0 : i32
    return %c0_i32, %c0_i32_0 : i32, i32
  }
  func.func @transform_5(%arg0: i32) -> (i32, i32) {
    %c0_i32 = arith.constant 0 : i32
    %c0_i32_0 = arith.constant 0 : i32
    %c0_i32_1 = arith.constant 0 : i32
    return %c0_i32, %c0_i32_0 : i32, i32
  }
  func.func @transform_6(%arg0: i32) -> (i32, i32) {
    %c0_i32 = arith.constant 0 : i32
    %c0_i32_0 = arith.constant 0 : i32
    %c0_i32_1 = arith.constant 0 : i32
    return %c0_i32, %c0_i32_0 : i32, i32
  }
  func.func @transform_7(%arg0: i32) -> (i32, i32) {
    %c0_i32 = arith.constant 0 : i32
    %c0_i32_0 = arith.constant 0 : i32
    return %arg0, %c0_i32 : i32, i32
  }
  func.func @transform_8(%arg0: i32) -> (i32, i32) {
    %c0_i32 = arith.constant 0 : i32
    %c0_i32_0 = arith.constant 0 : i32
    return %arg0, %c0_i32 : i32, i32
  }
}

</mosaic_0001>

<llo_original>
// kernel: tpu_custom_call.1
$region0: #{tpu_custom_call.1}
  #allocation0 [shape = 'u32[]', space=smem, size = 0x4, offset = 0x4, fixed_abs, tag = 'smem constant byte address 0x4 - core index']
  #allocation1 [shape = 'u32[144,128]{1,0:T(1,128)}', space=vmem, size = 0x12000, scoped, tag = 'internal scratch']
  %s0 = inlined_call_operand.hbm [shape: f32[8,128], index: 0, kind: input, shape index: {}]
  %s1 = inlined_call_operand.hbm [shape: f32[128,128], index: 1, kind: input, shape index: {}]
  %s2 = inlined_call_operand.hbm [shape: f32[1,128], index: 2, kind: input, shape index: {}]
  %s3 = inlined_call_operand.hbm [shape: f32[128,128], index: 3, kind: input, shape index: {}]
  %s4 = inlined_call_operand.hbm [shape: f32[1,128], index: 4, kind: input, shape index: {}]
  %s5 = inlined_call_operand.hbm [shape: f32[128,128], index: 5, kind: input, shape index: {}]
  %s6 = inlined_call_operand.hbm [shape: f32[1,128], index: 6, kind: input, shape index: {}]
  %s7 = inlined_call_operand.hbm [shape: f32[8,3], index: 7, kind: output, shape index: {0}]
  %s8 = inlined_call_operand.hbm [shape: f32[8,32], index: 8, kind: output, shape index: {1}]
  %9 = xla_tuple %s7, %s8
  %s10 = sld [smem:[#allocation0]]
  $region74: #{tpu_custom_call.1} parent=0
    _
  %s12 = ssub.s32 1, %s10
  %s13 = scalar_select 0, %s12, %s10
  $region1: #{tpu_custom_call.1} parent=0
    #allocation2 [shape = 'u8[4096]{0}', space=vmem, size = 0x1000, scoped, tag = 'input window, operand 0, single buffered']
    #allocation3 [shape = 's32[1]{0}', space=sflag, size = 0x4, scoped, tag = 'scoped memory for tpu_custom_call.1']
    #allocation4 [shape = 's32[1]{0}', space=sflag, size = 0x4, scoped, tag = 'scoped memory for tpu_custom_call.1']
    #allocation5 [shape = 'u8[65536]{0}', space=vmem, size = 0x10000, scoped, tag = 'input window, operand 1, single buffered']
    #allocation6 [shape = 's32[1]{0}', space=sflag, size = 0x4, scoped, tag = 'scoped memory for tpu_custom_call.1']
    #allocation7 [shape = 'u8[512]{0}', space=vmem, size = 0x400, scoped, tag = 'input window, operand 2, single buffered']
    #allocation8 [shape = 'u8[65536]{0}', space=vmem, size = 0x10000, scoped, tag = 'input window, operand 3, single buffered']
    #allocation9 [shape = 's32[1]{0}', space=sflag, size = 0x4, scoped, tag = 'scoped memory for tpu_custom_call.1']
    #allocation10 [shape = 'u8[512]{0}', space=vmem, size = 0x400, scoped, tag = 'input window, operand 4, single buffered']
    #allocation11 [shape = 'u8[65536]{0}', space=vmem, size = 0x10000, scoped, tag = 'input window, operand 5, single buffered']
    #allocation12 [shape = 's32[1]{0}', space=sflag, size = 0x4, scoped, tag = 'scoped memory for tpu_custom_call.1']
    #allocation13 [shape = 'u8[512]{0}', space=vmem, size = 0x400, scoped, tag = 'input window, operand 6, single buffered']
    #allocation14 [shape = 'u8[4096]{0}', space=vmem, size = 0x1000, scoped, tag = 'output window, operand 0, single buffered']
    #allocation15 [shape = 'u8[4096]{0}', space=vmem, size = 0x1000, scoped, tag = 'output window, operand 1, single buffered']
    #allocation16 [shape = 's32[1]{0}', space=sflag, size = 0x4, scoped, tag = 'scoped memory for tpu_custom_call.1']
    %14 = vsyncpa [#allocation3], 0
    %15 = vsyncpa [#allocation6], 0
    %16 = vsyncpa [#allocation9], 0
    %17 = vsyncpa [#allocation12], 0
    %18 = vsyncpa [#allocation4], 0
    %19 = vsyncpa [#allocation16], 0
    // Predicated region
    $region2: #{tpu_custom_call.1} parent=1 // pred_check
      _
    $region3: #{tpu_custom_call.1} parent=1 // pred_check_branch
      %21 = sbr.rel (0) target = $region5
    $region4: #{tpu_custom_call.1} parent=1 // pred_region
      %s23 = ssub.s32 128, 128
      %24 = vsyncadd [#allocation3], %s23
      %s26 = sshll.u32 [#allocation2], 4
      %s27 = int_to_ptr.vmem [resolvable:$true] %s26
      %29 = dma.hbm_to_vmem [thread:$0]  %s0, 128, %s27, [#allocation3]
    $region5: #{tpu_custom_call.1} parent=1 // pred_fallthru
      _
    // Predicated region
    $region6: #{tpu_custom_call.1} parent=1 // pred_check
      _
    $region7: #{tpu_custom_call.1} parent=1 // pred_check_branch
      %31 = sbr.rel (0) target = $region9
    $region8: #{tpu_custom_call.1} parent=1 // pred_region
      %s33 = ssub.s32 2048, 2048
      %34 = vsyncadd [#allocation6], %s33
      %s35 = sshll.u32 [#allocation5], 4
      %s36 = int_to_ptr.vmem [resolvable:$true] %s35
      %41 = dma.hbm_to_vmem [thread:$0]  %s1, 2048, %s36, [#allocation6], 128, 128, 8
    $region9: #{tpu_custom_call.1} parent=1 // pred_fallthru
      _
    // Predicated region
    $region10: #{tpu_custom_call.1} parent=1 // pred_check
      _
    $region11: #{tpu_custom_call.1} parent=1 // pred_check_branch
      %43 = sbr.rel (0) target = $region13
    $region12: #{tpu_custom_call.1} parent=1 // pred_region
      %s45 = ssub.s32 16, 16
      %46 = vsyncadd [#allocation6], %s45
      %s48 = sshll.u32 [#allocation7], 4
      %s49 = int_to_ptr.vmem [resolvable:$true] %s48
      %51 = dma.hbm_to_vmem [thread:$0]  %s2, 16, %s49, [#allocation6]
    $region13: #{tpu_custom_call.1} parent=1 // pred_fallthru
      _
    // Predicated region
    $region14: #{tpu_custom_call.1} parent=1 // pred_check
      _
    $region15: #{tpu_custom_call.1} parent=1 // pred_check_branch
      %53 = sbr.rel (0) target = $region17
    $region16: #{tpu_custom_call.1} parent=1 // pred_region
      %s55 = ssub.s32 2048, 2048
      %56 = vsyncadd [#allocation9], %s55
      %s57 = sshll.u32 [#allocation8], 4
      %s58 = int_to_ptr.vmem [resolvable:$true] %s57
      %63 = dma.hbm_to_vmem [thread:$0]  %s3, 2048, %s58, [#allocation9], 128, 128, 8
    $region17: #{tpu_custom_call.1} parent=1 // pred_fallthru
      _
    // Predicated region
    $region18: #{tpu_custom_call.1} parent=1 // pred_check
      _
    $region19: #{tpu_custom_call.1} parent=1 // pred_check_branch
      %65 = sbr.rel (0) target = $region21
    $region20: #{tpu_custom_call.1} parent=1 // pred_region
      %s67 = ssub.s32 16, 16
      %68 = vsyncadd [#allocation9], %s67
      %s70 = sshll.u32 [#allocation10], 4
      %s71 = int_to_ptr.vmem [resolvable:$true] %s70
      %73 = dma.hbm_to_vmem [thread:$0]  %s4, 16, %s71, [#allocation9]
    $region21: #{tpu_custom_call.1} parent=1 // pred_fallthru
      _
    // Predicated region
    $region22: #{tpu_custom_call.1} parent=1 // pred_check
      _
    $region23: #{tpu_custom_call.1} parent=1 // pred_check_branch
      %75 = sbr.rel (0) target = $region25
    $region24: #{tpu_custom_call.1} parent=1 // pred_region
      %s77 = ssub.s32 2048, 2048
      %78 = vsyncadd [#allocation12], %s77
      %s79 = sshll.u32 [#allocation11], 4
      %s80 = int_to_ptr.vmem [resolvable:$true] %s79
      %85 = dma.hbm_to_vmem [thread:$0]  %s5, 2048, %s80, [#allocation12], 128, 128, 8
    $region25: #{tpu_custom_call.1} parent=1 // pred_fallthru
      _
    // Predicated region
    $region26: #{tpu_custom_call.1} parent=1 // pred_check
      _
    $region27: #{tpu_custom_call.1} parent=1 // pred_check_branch
      %87 = sbr.rel (0) target = $region29
    $region28: #{tpu_custom_call.1} parent=1 // pred_region
      %s89 = ssub.s32 16, 16
      %90 = vsyncadd [#allocation12], %s89
      %s92 = sshll.u32 [#allocation13], 4
      %s93 = int_to_ptr.vmem [resolvable:$true] %s92
      %95 = dma.hbm_to_vmem [thread:$0]  %s6, 16, %s93, [#allocation12]
    $region29: #{tpu_custom_call.1} parent=1 // pred_fallthru
      _
    // Predicated region
    $region30: #{tpu_custom_call.1} parent=1 // pred_check
      _
    $region31: #{tpu_custom_call.1} parent=1 // pred_check_branch
      %97 = sbr.rel (0) target = $region33
    $region32: #{tpu_custom_call.1} parent=1 // pred_region
      %98 = dma.done [#allocation3], 128
    $region33: #{tpu_custom_call.1} parent=1 // pred_fallthru
      _
    // Predicated region
    $region34: #{tpu_custom_call.1} parent=1 // pred_check
      _
    $region35: #{tpu_custom_call.1} parent=1 // pred_check_branch
      %100 = sbr.rel (0) target = $region37
    $region36: #{tpu_custom_call.1} parent=1 // pred_region
      %101 = dma.done [#allocation6], 2048
    $region37: #{tpu_custom_call.1} parent=1 // pred_fallthru
      _
    // Predicated region
    $region38: #{tpu_custom_call.1} parent=1 // pred_check
      _
    $region39: #{tpu_custom_call.1} parent=1 // pred_check_branch
      %103 = sbr.rel (0) target = $region41
    $region40: #{tpu_custom_call.1} parent=1 // pred_region
      %104 = dma.done [#allocation6], 16
    $region41: #{tpu_custom_call.1} parent=1 // pred_fallthru
      _
    // Predicated region
    $region42: #{tpu_custom_call.1} parent=1 // pred_check
      _
    $region43: #{tpu_custom_call.1} parent=1 // pred_check_branch
      %106 = sbr.rel (0) target = $region45
    $region44: #{tpu_custom_call.1} parent=1 // pred_region
      %107 = dma.done [#allocation9], 2048
    $region45: #{tpu_custom_call.1} parent=1 // pred_fallthru
      _
    // Predicated region
    $region46: #{tpu_custom_call.1} parent=1 // pred_check
      _
    $region47: #{tpu_custom_call.1} parent=1 // pred_check_branch
      %109 = sbr.rel (0) target = $region49
    $region48: #{tpu_custom_call.1} parent=1 // pred_region
      %110 = dma.done [#allocation9], 16
    $region49: #{tpu_custom_call.1} parent=1 // pred_fallthru
      _
    // Predicated region
    $region50: #{tpu_custom_call.1} parent=1 // pred_check
      _
    $region51: #{tpu_custom_call.1} parent=1 // pred_check_branch
      %112 = sbr.rel (0) target = $region53
    $region52: #{tpu_custom_call.1} parent=1 // pred_region
      %113 = dma.done [#allocation12], 2048
    $region53: #{tpu_custom_call.1} parent=1 // pred_fallthru
      _
    // Predicated region
    $region54: #{tpu_custom_call.1} parent=1 // pred_check
      _
    $region55: #{tpu_custom_call.1} parent=1 // pred_check_branch
      %115 = sbr.rel (0) target = $region57
    $region56: #{tpu_custom_call.1} parent=1 // pred_region
      %116 = dma.done [#allocation12], 16
    $region57: #{tpu_custom_call.1} parent=1 // pred_fallthru
      _
    %v117 = vld [vmem:[#allocation2] sm:$0xff]
    %v118 = vld [vmem:[#allocation5] sm:$0xff]
    %v119 = vld [vmem:[#allocation5 + $0x8] sm:$0xff]
    %v120 = vld [vmem:[#allocation5 + $0x10] sm:$0xff]
    %v121 = vld [vmem:[#allocation5 + $0x18] sm:$0xff]
    %v122 = vld [vmem:[#allocation5 + $0x20] sm:$0xff]
    %v123 = vld [vmem:[#allocation5 + $0x28] sm:$0xff]
    %v124 = vld [vmem:[#allocation5 + $0x30] sm:$0xff]
    %v125 = vld [vmem:[#allocation5 + $0x38] sm:$0xff]
    %v126 = vld [vmem:[#allocation5 + $0x40] sm:$0xff]
    %v127 = vld [vmem:[#allocation5 + $0x48] sm:$0xff]
    %v128 = vld [vmem:[#allocation5 + $0x50] sm:$0xff]
    %v129 = vld [vmem:[#allocation5 + $0x58] sm:$0xff]
    %v130 = vld [vmem:[#allocation5 + $0x60] sm:$0xff]
    %v131 = vld [vmem:[#allocation5 + $0x68] sm:$0xff]
    %v132 = vld [vmem:[#allocation5 + $0x70] sm:$0xff]
    %v133 = vld [vmem:[#allocation5 + $0x78] sm:$0xff]
    %v134 = vld [vmem:[#allocation7] sm:$0x1]
    %v136 = vlaneseq
    %v137 = vshrl.u32 %v136, 7
    %v138 = vsub.s32 0, %v137
    %v139 = vrot.slane %v134, %v138
    %141 = vmatprep.subr.mxu0 0.0
    %142 = vmatpush1.msra.mxu0 %v118
    %143 = vmatprep.subr.mxu0 0.0
    %144 = vmatpush1.msra.mxu0 %v119
    %145 = vmatprep.subr.mxu0 0.0
    %146 = vmatpush1.msra.mxu0 %v120
    %147 = vmatprep.subr.mxu0 0.0
    %148 = vmatpush1.msra.mxu0 %v121
    %149 = vmatprep.subr.mxu0 0.0
    %150 = vmatpush1.msra.mxu0 %v122
    %151 = vmatprep.subr.mxu0 0.0
    %152 = vmatpush1.msra.mxu0 %v123
    %153 = vmatprep.subr.mxu0 0.0
    %154 = vmatpush1.msra.mxu0 %v124
    %155 = vmatprep.subr.mxu0 0.0
    %156 = vmatpush1.msra.mxu0 %v125
    %157 = vmatprep.subr.mxu0 0.0
    %158 = vmatpush1.msra.mxu0 %v126
    %159 = vmatprep.subr.mxu0 0.0
    %160 = vmatpush1.msra.mxu0 %v127
    %161 = vmatprep.subr.mxu0 0.0
    %162 = vmatpush1.msra.mxu0 %v128
    %163 = vmatprep.subr.mxu0 0.0
    %164 = vmatpush1.msra.mxu0 %v129
    %165 = vmatprep.subr.mxu0 0.0
    %166 = vmatpush1.msra.mxu0 %v130
    %167 = vmatprep.subr.mxu0 0.0
    %168 = vmatpush1.msra.mxu0 %v131
    %169 = vmatprep.subr.mxu0 0.0
    %170 = vmatpush1.msra.mxu0 %v132
    %171 = vmatprep.subr.mxu0 0.0
    %172 = vmatpush1.msra.mxu0 %v133
    %173 = vmatprep.subr.mxu0 0.0
    %174 = vmatpush1.msra.mxu0 0.0
    %175 = vmatprep.subr.mxu0 0.0
    %176 = vmatpush1.msra.mxu0 0.0
    %177 = vmatprep.subr.mxu0 0.0
    %178 = vmatpush1.msra.mxu0 0.0
    %179 = vmatprep.subr.mxu0 0.0
    %180 = vmatpush1.msra.mxu0 0.0
    %181 = vmatprep.subr.mxu0 0.0
    %182 = vmatpush1.msra.mxu0 0.0
    %183 = vmatprep.subr.mxu0 0.0
    %184 = vmatpush1.msra.mxu0 0.0
    %185 = vmatprep.subr.mxu0 0.0
    %186 = vmatpush1.msra.mxu0 0.0
    %187 = vmatprep.subr.mxu0 0.0
    %188 = vmatpush1.msra.mxu0 0.0
    %189 = vmatprep.subr.mxu0 0.0
    %190 = vmatpush1.msra.mxu0 0.0
    %191 = vmatprep.subr.mxu0 0.0
    %192 = vmatpush1.msra.mxu0 0.0
    %193 = vmatprep.subr.mxu0 0.0
    %194 = vmatpush1.msra.mxu0 0.0
    %195 = vmatprep.subr.mxu0 0.0
    %196 = vmatpush1.msra.mxu0 0.0
    %197 = vmatprep.subr.mxu0 0.0
    %198 = vmatpush1.msra.mxu0 0.0
    %199 = vmatprep.subr.mxu0 0.0
    %200 = vmatpush1.msra.mxu0 0.0
    %201 = vmatprep.subr.mxu0 0.0
    %202 = vmatpush1.msra.mxu0 0.0
    %203 = vmatprep.subr.mxu0 0.0
    %204 = vmatpush1.msra.mxu0 0.0
    %205 = vmatprep.mubr.f32.mxu0 0.0
    %206 = vmatmul.mubr.f32.gmra.mrb[0].mxu0 %v117
    %v207 = vpop.f32.mrb[0].mxu0
    %v208 = vadd.f32 %v139, %v207
    %v209 = vpop.f32.mrb[0].mxu0
    %210 = vdwg.mxu0
    %vm211 = vcmask 261120
    %212 = vst.msk [vmem:[#allocation15] sm:$0xff] %vm211, %v208
    %v213 = vmax.f32 %v208, 0.0
    %v214 = vld [vmem:[#allocation8] sm:$0xff]
    %v215 = vld [vmem:[#allocation8 + $0x8] sm:$0xff]
    %v216 = vld [vmem:[#allocation8 + $0x10] sm:$0xff]
    %v217 = vld [vmem:[#allocation8 + $0x18] sm:$0xff]
    %v218 = vld [vmem:[#allocation8 + $0x20] sm:$0xff]
    %v219 = vld [vmem:[#allocation8 + $0x28] sm:$0xff]
    %v220 = vld [vmem:[#allocation8 + $0x30] sm:$0xff]
    %v221 = vld [vmem:[#allocation8 + $0x38] sm:$0xff]
    %v222 = vld [vmem:[#allocation8 + $0x40] sm:$0xff]
    %v223 = vld [vmem:[#allocation8 + $0x48] sm:$0xff]
    %v224 = vld [vmem:[#allocation8 + $0x50] sm:$0xff]
    %v225 = vld [vmem:[#allocation8 + $0x58] sm:$0xff]
    %v226 = vld [vmem:[#allocation8 + $0x60] sm:$0xff]
    %v227 = vld [vmem:[#allocation8 + $0x68] sm:$0xff]
    %v228 = vld [vmem:[#allocation8 + $0x70] sm:$0xff]
    %v229 = vld [vmem:[#allocation8 + $0x78] sm:$0xff]
    %v230 = vld [vmem:[#allocation10] sm:$0x1]
    %v232 = vlaneseq
    %v233 = vshrl.u32 %v232, 7
    %v234 = vsub.s32 0, %v233
    %v235 = vrot.slane %v230, %v234
    %237 = vmatprep.subr.mxu0 0.0
    %238 = vmatpush1.msra.mxu0 %v214
    %239 = vmatprep.subr.mxu0 0.0
    %240 = vmatpush1.msra.mxu0 %v215
    %241 = vmatprep.subr.mxu0 0.0
    %242 = vmatpush1.msra.mxu0 %v216
    %243 = vmatprep.subr.mxu0 0.0
    %244 = vmatpush1.msra.mxu0 %v217
    %245 = vmatprep.subr.mxu0 0.0
    %246 = vmatpush1.msra.mxu0 %v218
    %247 = vmatprep.subr.mxu0 0.0
    %248 = vmatpush1.msra.mxu0 %v219
    %249 = vmatprep.subr.mxu0 0.0
    %250 = vmatpush1.msra.mxu0 %v220
    %251 = vmatprep.subr.mxu0 0.0
    %252 = vmatpush1.msra.mxu0 %v221
    %253 = vmatprep.subr.mxu0 0.0
    %254 = vmatpush1.msra.mxu0 %v222
    %255 = vmatprep.subr.mxu0 0.0
    %256 = vmatpush1.msra.mxu0 %v223
    %257 = vmatprep.subr.mxu0 0.0
    %258 = vmatpush1.msra.mxu0 %v224
    %259 = vmatprep.subr.mxu0 0.0
    %260 = vmatpush1.msra.mxu0 %v225
    %261 = vmatprep.subr.mxu0 0.0
    %262 = vmatpush1.msra.mxu0 %v226
    %263 = vmatprep.subr.mxu0 0.0
    %264 = vmatpush1.msra.mxu0 %v227
    %265 = vmatprep.subr.mxu0 0.0
    %266 = vmatpush1.msra.mxu0 %v228
    %267 = vmatprep.subr.mxu0 0.0
    %268 = vmatpush1.msra.mxu0 %v229
    %269 = vmatprep.subr.mxu0 0.0
    %270 = vmatpush1.msra.mxu0 0.0
    %271 = vmatprep.subr.mxu0 0.0
    %272 = vmatpush1.msra.mxu0 0.0
    %273 = vmatprep.subr.mxu0 0.0
    %274 = vmatpush1.msra.mxu0 0.0
    %275 = vmatprep.subr.mxu0 0.0
    %276 = vmatpush1.msra.mxu0 0.0
    %277 = vmatprep.subr.mxu0 0.0
    %278 = vmatpush1.msra.mxu0 0.0
    %279 = vmatprep.subr.mxu0 0.0
    %280 = vmatpush1.msra.mxu0 0.0
    %281 = vmatprep.subr.mxu0 0.0
    %282 = vmatpush1.msra.mxu0 0.0
    %283 = vmatprep.subr.mxu0 0.0
    %284 = vmatpush1.msra.mxu0 0.0
    %285 = vmatprep.subr.mxu0 0.0
    %286 = vmatpush1.msra.mxu0 0.0
    %287 = vmatprep.subr.mxu0 0.0
    %288 = vmatpush1.msra.mxu0 0.0
    %289 = vmatprep.subr.mxu0 0.0
    %290 = vmatpush1.msra.mxu0 0.0
    %291 = vmatprep.subr.mxu0 0.0
    %292 = vmatpush1.msra.mxu0 0.0
    %293 = vmatprep.subr.mxu0 0.0
    %294 = vmatpush1.msra.mxu0 0.0
    %295 = vmatprep.subr.mxu0 0.0
    %296 = vmatpush1.msra.mxu0 0.0
    %297 = vmatprep.subr.mxu0 0.0
    %298 = vmatpush1.msra.mxu0 0.0
    %299 = vmatprep.subr.mxu0 0.0
    %300 = vmatpush1.msra.mxu0 0.0
    %301 = vmatprep.mubr.f32.mxu0 0.0
    %302 = vmatmul.mubr.f32.gmra.mrb[0].mxu0 %v213
    %v303 = vpop.f32.mrb[0].mxu0
    %v304 = vadd.f32 %v235, %v303
    %v305 = vpop.f32.mrb[0].mxu0
    %306 = vdwg.mxu0
    %v307 = vmax.f32 %v304, 0.0
    %v308 = vand.u32 2147483647, %v304
    %v309 = vsub.f32 0.0, %v308
    %v310 = vmul.f32 %v309, 1.442695
    %v311 = vpow.pop %v310
    %v312 = vadd.f32 %v311, 1.0
    %v313 = vlog2.pop %v312
    %v314 = vmul.f32 %v313, 0.6931472
    %v315 = vmul.f32 -0.5, %v311
    %v316 = vadd.f32 %v315, 1.0
    %v317 = vmul.f32 %v316, %v311
    %v318 = vand.u32 2147483647, %v311
    %vm319 = vcmp.lt.f32.partialorder %v318, 0.0004427343
    %v320 = vsel %vm319, %v317, %v314
    %v321 = vadd.f32 %v307, %v320
    %v322 = vld [vmem:[#allocation11] sm:$0xff]
    %v323 = vld [vmem:[#allocation11 + $0x8] sm:$0xff]
    %v324 = vld [vmem:[#allocation11 + $0x10] sm:$0xff]
    %v325 = vld [vmem:[#allocation11 + $0x18] sm:$0xff]
    %v326 = vld [vmem:[#allocation11 + $0x20] sm:$0xff]
    %v327 = vld [vmem:[#allocation11 + $0x28] sm:$0xff]
    %v328 = vld [vmem:[#allocation11 + $0x30] sm:$0xff]
    %v329 = vld [vmem:[#allocation11 + $0x38] sm:$0xff]
    %v330 = vld [vmem:[#allocation11 + $0x40] sm:$0xff]
    %v331 = vld [vmem:[#allocation11 + $0x48] sm:$0xff]
    %v332 = vld [vmem:[#allocation11 + $0x50] sm:$0xff]
    %v333 = vld [vmem:[#allocation11 + $0x58] sm:$0xff]
    %v334 = vld [vmem:[#allocation11 + $0x60] sm:$0xff]
    %v335 = vld [vmem:[#allocation11 + $0x68] sm:$0xff]
    %v336 = vld [vmem:[#allocation11 + $0x70] sm:$0xff]
    %v337 = vld [vmem:[#allocation11 + $0x78] sm:$0xff]
    %v338 = vld [vmem:[#allocation13] sm:$0x1]
    %v340 = vlaneseq
    %v341 = vshrl.u32 %v340, 7
    %v342 = vsub.s32 0, %v341
    %v343 = vrot.slane %v338, %v342
    %345 = vmatprep.subr.mxu0 0.0
    %346 = vmatpush1.msra.mxu0 %v322
    %347 = vmatprep.subr.mxu0 0.0
    %348 = vmatpush1.msra.mxu0 %v323
    %349 = vmatprep.subr.mxu0 0.0
    %350 = vmatpush1.msra.mxu0 %v324
    %351 = vmatprep.subr.mxu0 0.0
    %352 = vmatpush1.msra.mxu0 %v325
    %353 = vmatprep.subr.mxu0 0.0
    %354 = vmatpush1.msra.mxu0 %v326
    %355 = vmatprep.subr.mxu0 0.0
    %356 = vmatpush1.msra.mxu0 %v327
    %357 = vmatprep.subr.mxu0 0.0
    %358 = vmatpush1.msra.mxu0 %v328
    %359 = vmatprep.subr.mxu0 0.0
    %360 = vmatpush1.msra.mxu0 %v329
    %361 = vmatprep.subr.mxu0 0.0
    %362 = vmatpush1.msra.mxu0 %v330
    %363 = vmatprep.subr.mxu0 0.0
    %364 = vmatpush1.msra.mxu0 %v331
    %365 = vmatprep.subr.mxu0 0.0
    %366 = vmatpush1.msra.mxu0 %v332
    %367 = vmatprep.subr.mxu0 0.0
    %368 = vmatpush1.msra.mxu0 %v333
    %369 = vmatprep.subr.mxu0 0.0
    %370 = vmatpush1.msra.mxu0 %v334
    %371 = vmatprep.subr.mxu0 0.0
    %372 = vmatpush1.msra.mxu0 %v335
    %373 = vmatprep.subr.mxu0 0.0
    %374 = vmatpush1.msra.mxu0 %v336
    %375 = vmatprep.subr.mxu0 0.0
    %376 = vmatpush1.msra.mxu0 %v337
    %377 = vmatprep.subr.mxu0 0.0
    %378 = vmatpush1.msra.mxu0 0.0
    %379 = vmatprep.subr.mxu0 0.0
    %380 = vmatpush1.msra.mxu0 0.0
    %381 = vmatprep.subr.mxu0 0.0
    %382 = vmatpush1.msra.mxu0 0.0
    %383 = vmatprep.subr.mxu0 0.0
    %384 = vmatpush1.msra.mxu0 0.0
    %385 = vmatprep.subr.mxu0 0.0
    %386 = vmatpush1.msra.mxu0 0.0
    %387 = vmatprep.subr.mxu0 0.0
    %388 = vmatpush1.msra.mxu0 0.0
    %389 = vmatprep.subr.mxu0 0.0
    %390 = vmatpush1.msra.mxu0 0.0
    %391 = vmatprep.subr.mxu0 0.0
    %392 = vmatpush1.msra.mxu0 0.0
    %393 = vmatprep.subr.mxu0 0.0
    %394 = vmatpush1.msra.mxu0 0.0
    %395 = vmatprep.subr.mxu0 0.0
    %396 = vmatpush1.msra.mxu0 0.0
    %397 = vmatprep.subr.mxu0 0.0
    %398 = vmatpush1.msra.mxu0 0.0
    %399 = vmatprep.subr.mxu0 0.0
    %400 = vmatpush1.msra.mxu0 0.0
    %401 = vmatprep.subr.mxu0 0.0
    %402 = vmatpush1.msra.mxu0 0.0
    %403 = vmatprep.subr.mxu0 0.0
    %404 = vmatpush1.msra.mxu0 0.0
    %405 = vmatprep.subr.mxu0 0.0
    %406 = vmatpush1.msra.mxu0 0.0
    %407 = vmatprep.subr.mxu0 0.0
    %408 = vmatpush1.msra.mxu0 0.0
    %409 = vmatprep.mubr.f32.mxu0 0.0
    %410 = vmatmul.mubr.f32.gmra.mrb[0].mxu0 %v321
    %v411 = vpop.f32.mrb[0].mxu0
    %v412 = vadd.f32 %v343, %v411
    %v413 = vpop.f32.mrb[0].mxu0
    %414 = vdwg.mxu0
    %vm415 = vcmask 23552
    %416 = vst.msk [vmem:[#allocation14] sm:$0xff] %vm415, %v412
    // Predicated region
    $region58: #{tpu_custom_call.1} parent=1 // pred_check
      _
    $region59: #{tpu_custom_call.1} parent=1 // pred_check_branch
      %418 = sbr.rel (0) target = $region61
    $region60: #{tpu_custom_call.1} parent=1 // pred_region
      %s420 = ssub.s32 128, 128
      %421 = vsyncadd [#allocation4], %s420
      %s423 = sshll.u32 [#allocation14], 4
      %s424 = int_to_ptr.vmem [resolvable:$true] %s423
      %426 = dma.vmem_to_hbm [thread:$0]  %s424, 128, %s7, [#allocation4]
    $region61: #{tpu_custom_call.1} parent=1 // pred_fallthru
      _
    // Predicated region
    $region62: #{tpu_custom_call.1} parent=1 // pred_check
      _
    $region63: #{tpu_custom_call.1} parent=1 // pred_check_branch
      %428 = sbr.rel (0) target = $region65
    $region64: #{tpu_custom_call.1} parent=1 // pred_region
      %s430 = ssub.s32 128, 128
      %431 = vsyncadd [#allocation16], %s430
      %s433 = sshll.u32 [#allocation15], 4
      %s434 = int_to_ptr.vmem [resolvable:$true] %s433
      %436 = dma.vmem_to_hbm [thread:$0]  %s434, 128, %s8, [#allocation16]
    $region65: #{tpu_custom_call.1} parent=1 // pred_fallthru
      _
    // Predicated region
    $region66: #{tpu_custom_call.1} parent=1 // pred_check
      _
    $region67: #{tpu_custom_call.1} parent=1 // pred_check_branch
      %438 = sbr.rel (0) target = $region69
    $region68: #{tpu_custom_call.1} parent=1 // pred_region
      %439 = dma.done [#allocation4], 128
    $region69: #{tpu_custom_call.1} parent=1 // pred_fallthru
      _
    // Predicated region
    $region70: #{tpu_custom_call.1} parent=1 // pred_check
      _
    $region71: #{tpu_custom_call.1} parent=1 // pred_check_branch
      %441 = sbr.rel (0) target = $region73
    $region72: #{tpu_custom_call.1} parent=1 // pred_region
      %442 = dma.done [#allocation16], 128
    $region73: #{tpu_custom_call.1} parent=1 // pred_fallthru
      _
    %443 = vsyncpa [#allocation3], 1
    %444 = vsyncpa [#allocation6], 1
    %445 = vsyncpa [#allocation9], 1
    %446 = vsyncpa [#allocation12], 1
    %447 = vsyncpa [#allocation4], 1
    %448 = vsyncpa [#allocation16], 1

</llo_original>
